<compile_context>
chip_gen: v5e
topology: v5e:2x2
jax: 0.10.0
libtpu: 0.0.40
codegen_flags: <defaults>
</compile_context>

<pallas_src>
import functools
import math

import jax
import jax.numpy as jnp
from jax.experimental import pallas as pl
from jax.experimental.pallas import tpu as pltpu

EPS = 1e-5          # PyTorch LayerNorm default
_NEG = -1e30        # causal-mask fill (exp underflows to exactly 0)
_VMEM_LIMIT = 32 * 1024 * 1024   # safe on v5e/v6e/v7x, above the v5e default scoped limit


# ----------------------------------------------------------------------------
# tile-size helpers
# ----------------------------------------------------------------------------
def _pick_rows_tile(n_rows, n_cols, itemsize=4, target_bytes=2 << 20):
    """Rows-per-tile for 2-D (rows, C) kernels: full array if small, else a
    multiple of 8 sized for ~2 MiB tiles (good HBM-roofline utilisation)."""
    if n_rows <= 512:
        return n_rows
    tr = (target_bytes // (itemsize * max(n_cols, 1))) // 8 * 8
    return int(max(8, min(tr, n_rows)))


def _pick_seq_tile(S, B, C, itemsize=4, target_bytes=2 << 20):
    """Sequence tile for 3-D (S, B, C) kernels."""
    if S <= 64:
        return S
    ts = (target_bytes // (itemsize * max(B * C, 1))) // 8 * 8
    return int(max(8, min(ts, S)))


# ----------------------------------------------------------------------------
# kernel 1: fused LayerNorm + positional-encoding add
# ----------------------------------------------------------------------------
def _ln_pe_kernel(x_ref, pe_ref, g_ref, b_ref, o_ref):
    x = x_ref[...].astype(jnp.float32)                     # (TS, B, C)
    mu = jnp.mean(x, axis=-1, keepdims=True)
    xc = x - mu
    var = jnp.mean(xc * xc, axis=-1, keepdims=True)
    y = xc * jax.lax.rsqrt(var + EPS) * g_ref[...] + b_ref[...]
    pe = pe_ref[...][:, None, :]                           # (TS, 1, C) — one broadcast per tile
    o_ref[...] = (y + pe).astype(o_ref.dtype)


def layernorm_pos_enc(x, pe, gamma, beta):
    """x: (S, B, C); pe: (S, C) already in x.dtype; gamma/beta: (C,)."""
    S, B, C = x.shape
    TS = _pick_seq_tile(S, B, C)
    return pl.pallas_call(
        _ln_pe_kernel,
        out_shape=jax.ShapeDtypeStruct((S, B, C), x.dtype),
        grid=(pl.cdiv(S, TS),),
        in_specs=[
            pl.BlockSpec((TS, B, C), lambda i: (i, 0, 0)),
            pl.BlockSpec((TS, C), lambda i: (i, 0)),
            pl.BlockSpec((1, C), lambda i: (0, 0)),
            pl.BlockSpec((1, C), lambda i: (0, 0)),
        ],
        out_specs=pl.BlockSpec((TS, B, C), lambda i: (i, 0, 0)),
        compiler_params=pltpu.CompilerParams(
            dimension_semantics=("parallel",),
            vmem_limit_bytes=_VMEM_LIMIT,
        ),
    )(x, pe, gamma.reshape(1, C), beta.reshape(1, C))


# ----------------------------------------------------------------------------
# kernel 2: tiled linear  y = x @ W + b
# ----------------------------------------------------------------------------
def _linear_kernel(x_ref, w_ref, b_ref, o_ref):
    acc = jnp.dot(x_ref[...], w_ref[...], preferred_element_type=jnp.float32)
    o_ref[...] = (acc + b_ref[...]).astype(o_ref.dtype)


def linear(x2d, w, b):
    """x2d: (R, Cin); w: (Cin, Cout); b: (Cout,)."""
    R, Cin = x2d.shape
    Cout = w.shape[1]
    TR = _pick_rows_tile(R, max(Cin, Cout))
    return pl.pallas_call(
        _linear_kernel,
        out_shape=jax.ShapeDtypeStruct((R, Cout), x2d.dtype),
        grid=(pl.cdiv(R, TR),),
        in_specs=[
            pl.BlockSpec((TR, Cin), lambda i: (i, 0)),
            pl.BlockSpec((Cin, Cout), lambda i: (0, 0)),   # weights stay VMEM-resident
            pl.BlockSpec((1, Cout), lambda i: (0, 0)),
        ],
        out_specs=pl.BlockSpec((TR, Cout), lambda i: (i, 0)),
        compiler_params=pltpu.CompilerParams(
            dimension_semantics=("parallel",),
            vmem_limit_bytes=_VMEM_LIMIT,
        ),
    )(x2d, w, b.reshape(1, Cout))


# ----------------------------------------------------------------------------
# kernel 3: per-(batch, head) scaled-dot-product attention
# ----------------------------------------------------------------------------
def _attn_kernel(q_ref, k_ref, v_ref, o_ref, *, scale, causal):
    q = q_ref[0].astype(jnp.float32)                       # (Sq, D)
    k = k_ref[0].astype(jnp.float32)                       # (Sk, D)
    v = v_ref[0].astype(jnp.float32)                       # (Sk, D)
    s = jnp.dot(q, k.T, preferred_element_type=jnp.float32) * scale   # (Sq, Sk)
    if causal:
        qi = jax.lax.broadcasted_iota(jnp.int32, s.shape, 0)
        kj = jax.lax.broadcasted_iota(jnp.int32, s.shape, 1)
        s = jnp.where(kj <= qi, s, _NEG)
    m = jnp.max(s, axis=-1, keepdims=True)
    p = jnp.exp(s - m)
    denom = jnp.sum(p, axis=-1, keepdims=True)
    o = jnp.dot(p, v, preferred_element_type=jnp.float32) / denom
    o_ref[0] = o.astype(o_ref.dtype)


def mha_attention(q, k, v, *, causal):
    """q: (B*H, Sq, D); k, v: (B*H, Sk, D)."""
    BH, Sq, D = q.shape
    Sk = k.shape[1]
    kern = functools.partial(_attn_kernel, scale=1.0 / math.sqrt(D), causal=causal)
    return pl.pallas_call(
        kern,
        out_shape=jax.ShapeDtypeStruct((BH, Sq, D), q.dtype),
        grid=(BH,),
        in_specs=[
            pl.BlockSpec((1, Sq, D), lambda i: (i, 0, 0)),
            pl.BlockSpec((1, Sk, D), lambda i: (i, 0, 0)),
            pl.BlockSpec((1, Sk, D), lambda i: (i, 0, 0)),
        ],
        out_specs=pl.BlockSpec((1, Sq, D), lambda i: (i, 0, 0)),
        compiler_params=pltpu.CompilerParams(
            dimension_semantics=("parallel",),
            vmem_limit_bytes=_VMEM_LIMIT,
        ),
    )(q, k, v)


# ----------------------------------------------------------------------------
# kernel 4: fused residual (output + dropout(output) == 2*output at eval) + LayerNorm
# ----------------------------------------------------------------------------
def _res_ln_kernel(x_ref, g_ref, b_ref, o_ref):
    x = 2.0 * x_ref[...].astype(jnp.float32)               # dropout is identity in eval
    mu = jnp.mean(x, axis=-1, keepdims=True)
    xc = x - mu
    var = jnp.mean(xc * xc, axis=-1, keepdims=True)
    o_ref[...] = (xc * jax.lax.rsqrt(var + EPS) * g_ref[...] + b_ref[...]).astype(o_ref.dtype)


def residual_layernorm(x2d, gamma, beta):
    R, C = x2d.shape
    TR = _pick_rows_tile(R, C)
    return pl.pallas_call(
        _res_ln_kernel,
        out_shape=jax.ShapeDtypeStruct((R, C), x2d.dtype),
        grid=(pl.cdiv(R, TR),),
        in_specs=[
            pl.BlockSpec((TR, C), lambda i: (i, 0)),
            pl.BlockSpec((1, C), lambda i: (0, 0)),
            pl.BlockSpec((1, C), lambda i: (0, 0)),
        ],
        out_specs=pl.BlockSpec((TR, C), lambda i: (i, 0)),
        compiler_params=pltpu.CompilerParams(
            dimension_semantics=("parallel",),
            vmem_limit_bytes=_VMEM_LIMIT,
        ),
    )(x2d, gamma.reshape(1, C), beta.reshape(1, C))


# ----------------------------------------------------------------------------
# positional-encoding table (same math as the torch __init__)
# ----------------------------------------------------------------------------
def make_pe(in_channels: int, max_length: int) -> jnp.ndarray:
    position = jnp.arange(0, max_length, dtype=jnp.float32)[:, None]
    div_term = jnp.exp(
        jnp.arange(0, in_channels, 2, dtype=jnp.float32)
        * (-math.log(10000.0) / in_channels)
    )
    angles = position * div_term
    pe = jnp.zeros((max_length, in_channels), dtype=jnp.float32)
    pe = pe.at[:, 0::2].set(jnp.sin(angles))
    pe = pe.at[:, 1::2].set(jnp.cos(angles))
    return pe


# ----------------------------------------------------------------------------
# full DeepGlobalAttnLayer forward (single attn block, eval mode)
# ----------------------------------------------------------------------------
def deep_global_attn_forward(x, params, *, n_head, is_casual, spk_inp=None):
    S, B, C = x.shape
    H = n_head
    D = C // H
    dtype = x.dtype

    # 1. fused attn_in_norm + positional encoding
    pe = params["pe"][:S].astype(dtype)                    # (S, C), pre-cast in wrapper
    h = layernorm_pos_enc(x, pe, params["ln_in_g"], params["ln_in_b"])
    h2d = h.reshape(S * B, C)

    # 2a. Q/K/V projections
    w_in_t = params["w_in"].T                              # (C, 3C)
    b_in = params["b_in"]
    if spk_inp is None:
        qkv = linear(h2d, w_in_t, b_in)                    # (S*B, 3C)
        q2d, k2d, v2d = qkv[:, :C], qkv[:, C:2 * C], qkv[:, 2 * C:]
        Sk = S
        causal = bool(is_casual)
    else:
        Sk = spk_inp.shape[0]
        q2d = linear(h2d, w_in_t[:, :C], b_in[:C])
        kv = linear(spk_inp.reshape(Sk * B, C).astype(dtype), w_in_t[:, C:], b_in[C:])
        k2d, v2d = kv[:, :C], kv[:, C:]
        causal = False

    # 2b. split heads (plain-JAX layout plumbing)
    def to_heads(t2d, rows):
        return t2d.reshape(rows, B, H, D).transpose(1, 2, 0, 3).reshape(B * H, rows, D)

    qh = to_heads(q2d, S)
    kh = to_heads(k2d, Sk)
    vh = to_heads(v2d, Sk)

    oh = mha_attention(qh, kh, vh, causal=causal)          # (B*H, S, D)
    o2d = oh.reshape(B, H, S, D).transpose(2, 0, 1, 3).reshape(S * B, C)

    # 2c. output projection
    o2d = linear(o2d, params["w_out"].T, params["b_out"])

    # 3. residual + LayerNorm
    out2d = residual_layernorm(o2d, params["ln_out_g"], params["ln_out_b"])
    # TODO(synk): dropout layers are identity (eval-mode); training-mode dropout not implemented.
    return out2d.reshape(S, B, C), None                    # attns is always None in the module


# ----------------------------------------------------------------------------
# pure-JAX reference (same math as the PyTorch forward, eval mode)
# ----------------------------------------------------------------------------
def _ln_ref(x, g, b):
    mu = jnp.mean(x, axis=-1, keepdims=True)
    var = jnp.mean((x - mu) ** 2, axis=-1, keepdims=True)
    return (x - mu) * jax.lax.rsqrt(var + EPS) * g + b


def reference_forward(x, params, *, n_head, is_casual, spk_inp=None):
    S, B, C = x.shape
    H, D = n_head, C // n_head
    h = _ln_ref(x, params["ln_in_g"], params["ln_in_b"])
    h = h + params["pe"][:S][:, None, :]
    kv_src = h if spk_inp is None else spk_inp
    Sk = kv_src.shape[0]
    w_in, b_in = params["w_in"], params["b_in"]
    q = h @ w_in[:C].T + b_in[:C]
    k = kv_src @ w_in[C:2 * C].T + b_in[C:2 * C]
    v = kv_src @ w_in[2 * C:].T + b_in[2 * C:]
    qh = q.reshape(S, B, H, D).transpose(1, 2, 0, 3)
    kh = k.reshape(Sk, B, H, D).transpose(1, 2, 0, 3)
    vh = v.reshape(Sk, B, H, D).transpose(1, 2, 0, 3)
    s = jnp.einsum("bhqd,bhkd->bhqk", qh, kh) / math.sqrt(D)
    if spk_inp is None and is_casual:
        qi = jnp.arange(S)[:, None]
        kj = jnp.arange(Sk)[None, :]
        s = jnp.where(kj <= qi, s, -jnp.inf)
    p = jax.nn.softmax(s, axis=-1)
    o = jnp.einsum("bhqk,bhkd->bhqd", p, vh)
    o = o.transpose(2, 0, 1, 3).reshape(S, B, C)
    o = o @ params["w_out"].T + params["b_out"]
    out = _ln_ref(o + o, params["ln_out_g"], params["ln_out_b"])
    return out, None


if __name__ == "__main__":
    jax.config.update("jax_default_matmul_precision", "highest")

    in_channels = 32
    n_head = 4
    seq_len = 8
    batch = 2
    is_casual = True
    C = in_channels

    key = jax.random.PRNGKey(0)
    ks = jax.random.split(key, 8)
    x = jax.random.normal(ks[0], (seq_len, batch, in_channels), dtype=jnp.float32)

    params = {
        "pe": make_pe(C, 500),
        "ln_in_g": 1.0 + 0.1 * jax.random.normal(ks[1], (C,), jnp.float32),
        "ln_in_b": 0.1 * jax.random.normal(ks[2], (C,), jnp.float32),
        "w_in": jax.random.normal(ks[3], (3 * C, C), jnp.float32) / math.sqrt(C),
        "b_in": 0.1 * jax.random.normal(ks[4], (3 * C,), jnp.float32),
        "w_out": jax.random.normal(ks[5], (C, C), jnp.float32) / math.sqrt(C),
        "b_out": 0.1 * jax.random.normal(ks[6], (C,), jnp.float32),
        "ln_out_g": 1.0 + 0.1 * jax.random.normal(ks[7], (C,), jnp.float32),
        "ln_out_b": jnp.zeros((C,), jnp.float32),
    }

    out, attns = deep_global_attn_forward(x, params, n_head=n_head, is_casual=is_casual)
    out = jax.block_until_ready(out)

    ref, _ = reference_forward(x, params, n_head=n_head, is_casual=is_casual)
    assert out.shape == (seq_len, batch, in_channels)
    assert attns is None
    max_err = float(jnp.max(jnp.abs(out - ref)))
    assert jnp.allclose(out, ref, atol=2e-4, rtol=2e-4), f"mismatch vs reference, max err {max_err}"

    print("KERNEL_OK")
</pallas_src>

<mosaic_0001>
module attributes {stable_mosaic.version = 11 : i64} {
  func.func @_ln_pe_kernel(%arg0: i32, %arg1: memref<8x2x32xf32, #tpu.memory_space<vmem>>, %arg2: memref<8x32xf32, #tpu.memory_space<vmem>>, %arg3: memref<1x32xf32, #tpu.memory_space<vmem>>, %arg4: memref<1x32xf32, #tpu.memory_space<vmem>>, %arg5: memref<8x2x32xf32, #tpu.memory_space<vmem>>) attributes {dimension_semantics = [#tpu.dimension_semantics<parallel>], iteration_bounds = array<i64: 1>, scalar_prefetch = 0 : i64, scratch_operands = 0 : i64, tpu.core_type = #tpu.core_type<tc>, window_params = [{transform_indices = @transform_0, window_bounds = array<i64: 8, 2, 32>}, {transform_indices = @transform_1, window_bounds = array<i64: 8, 32>}, {pipeline_mode = #tpu.pipeline_mode<synchronous>, transform_indices = @transform_2, window_bounds = array<i64: 1, 32>}, {pipeline_mode = #tpu.pipeline_mode<synchronous>, transform_indices = @transform_3, window_bounds = array<i64: 1, 32>}, {transform_indices = @transform_4, window_bounds = array<i64: 8, 2, 32>}]} {
    %c0 = arith.constant 0 : index
    %c0_0 = arith.constant 0 : index
    %c0_1 = arith.constant 0 : index
    %0 = vector.load %arg1[%c0, %c0_0, %c0_1] : memref<8x2x32xf32, #tpu.memory_space<vmem>>, vector<8x2x32xf32>
    %cst = arith.constant dense<0.000000e+00> : vector<8x2xf32>
    %1 = vector.multi_reduction <add>, %0, %cst [2] : vector<8x2x32xf32> to vector<8x2xf32>
    %2 = vector.shape_cast %1 : vector<8x2xf32> to vector<8x2x1xf32>
    %cst_2 = arith.constant 3.200000e+01 : f32
    %3 = vector.broadcast %cst_2 : f32 to vector<8x2x1xf32>
    %4 = arith.divf %2, %3 : vector<8x2x1xf32>
    %5 = vector.broadcast %4 : vector<8x2x1xf32> to vector<8x2x32xf32>
    %6 = arith.subf %0, %5 : vector<8x2x32xf32>
    %7 = arith.mulf %6, %6 : vector<8x2x32xf32>
    %cst_3 = arith.constant dense<0.000000e+00> : vector<8x2xf32>
    %8 = vector.multi_reduction <add>, %7, %cst_3 [2] : vector<8x2x32xf32> to vector<8x2xf32>
    %9 = vector.shape_cast %8 : vector<8x2xf32> to vector<8x2x1xf32>
    %cst_4 = arith.constant 3.200000e+01 : f32
    %10 = vector.broadcast %cst_4 : f32 to vector<8x2x1xf32>
    %11 = arith.divf %9, %10 : vector<8x2x1xf32>
    %cst_5 = arith.constant 9.99999974E-6 : f32
    %12 = vector.broadcast %cst_5 : f32 to vector<8x2x1xf32>
    %13 = arith.addf %11, %12 : vector<8x2x1xf32>
    %14 = math.rsqrt %13 : vector<8x2x1xf32>
    %15 = vector.broadcast %14 : vector<8x2x1xf32> to vector<8x2x32xf32>
    %16 = arith.mulf %6, %15 : vector<8x2x32xf32>
    %c0_6 = arith.constant 0 : index
    %c0_7 = arith.constant 0 : index
    %17 = vector.load %arg3[%c0_6, %c0_7] : memref<1x32xf32, #tpu.memory_space<vmem>>, vector<1x32xf32>
    %18 = vector.shape_cast %17 : vector<1x32xf32> to vector<1x1x32xf32>
    %19 = vector.broadcast %18 : vector<1x1x32xf32> to vector<8x2x32xf32>
    %20 = arith.mulf %16, %19 : vector<8x2x32xf32>
    %c0_8 = arith.constant 0 : index
    %c0_9 = arith.constant 0 : index
    %21 = vector.load %arg4[%c0_8, %c0_9] : memref<1x32xf32, #tpu.memory_space<vmem>>, vector<1x32xf32>
    %22 = vector.shape_cast %21 : vector<1x32xf32> to vector<1x1x32xf32>
    %23 = vector.broadcast %22 : vector<1x1x32xf32> to vector<8x2x32xf32>
    %24 = arith.addf %20, %23 : vector<8x2x32xf32>
    %c0_10 = arith.constant 0 : index
    %c0_11 = arith.constant 0 : index
    %25 = vector.load %arg2[%c0_10, %c0_11] : memref<8x32xf32, #tpu.memory_space<vmem>>, vector<8x32xf32>
    %26 = vector.shape_cast %25 : vector<8x32xf32> to vector<8x1x32xf32>
    %27 = vector.broadcast %26 : vector<8x1x32xf32> to vector<8x2x32xf32>
    %28 = arith.addf %24, %27 : vector<8x2x32xf32>
    %c0_12 = arith.constant 0 : index
    %c0_13 = arith.constant 0 : index
    %c0_14 = arith.constant 0 : index
    %29 = vector.load %arg5[%c0_12, %c0_13, %c0_14] : memref<8x2x32xf32, #tpu.memory_space<vmem>>, vector<8x2x32xf32>
    tpu.vector_store %arg5[%c0_12, %c0_13, %c0_14], %28 {strides = array<i32>} : memref<8x2x32xf32, #tpu.memory_space<vmem>>, vector<8x2x32xf32>,
    return
  }
  func.func @transform_0(%arg0: i32) -> (i32, i32, i32) {
    %c0_i32 = arith.constant 0 : i32
    %c0_i32_0 = arith.constant 0 : i32
    %c0_i32_1 = arith.constant 0 : i32
    return %arg0, %c0_i32, %c0_i32_0 : i32, i32, i32
  }
  func.func @transform_1(%arg0: i32) -> (i32, i32) {
    %c0_i32 = arith.constant 0 : i32
    %c0_i32_0 = arith.constant 0 : i32
    return %arg0, %c0_i32 : i32, i32
  }
  func.func @transform_2(%arg0: i32) -> (i32, i32) {
    %c0_i32 = arith.constant 0 : i32
    %c0_i32_0 = arith.constant 0 : i32
    %c0_i32_1 = arith.constant 0 : i32
    return %c0_i32, %c0_i32_0 : i32, i32
  }
  func.func @transform_3(%arg0: i32) -> (i32, i32) {
    %c0_i32 = arith.constant 0 : i32
    %c0_i32_0 = arith.constant 0 : i32
    %c0_i32_1 = arith.constant 0 : i32
    return %c0_i32, %c0_i32_0 : i32, i32
  }
  func.func @transform_4(%arg0: i32) -> (i32, i32, i32) {
    %c0_i32 = arith.constant 0 : i32
    %c0_i32_0 = arith.constant 0 : i32
    %c0_i32_1 = arith.constant 0 : i32
    return %arg0, %c0_i32, %c0_i32_0 : i32, i32, i32
  }
}

</mosaic_0001>

<llo_original>
// kernel: tpu_custom_call.1
$region0: #{tpu_custom_call.1}
  #allocation0 [shape = 'u32[]', space=smem, size = 0x4, offset = 0x4, fixed_abs, tag = 'smem constant byte address 0x4 - core index']
  #allocation1 [shape = 'u32[72,128]{1,0:T(1,128)}', space=vmem, size = 0x9000, scoped, tag = 'internal scratch']
  %s0 = inlined_call_operand.hbm [shape: f32[8,2,32], index: 0, kind: input, shape index: {}]
  %s1 = inlined_call_operand.hbm [shape: f32[8,32], index: 1, kind: input, shape index: {}]
  %s2 = inlined_call_operand.vmem [shape: f32[1,32], index: 2, kind: input, shape index: {}]
  %s3 = inlined_call_operand.vmem [shape: f32[1,32], index: 3, kind: input, shape index: {}]
  %s4 = inlined_call_operand.hbm [shape: f32[8,2,32], index: 4, kind: output, shape index: {}]
  %s5 = sld [smem:[#allocation0]]
  $region34: #{tpu_custom_call.1} parent=0
    _
  %s7 = ssub.s32 1, %s5
  %s8 = scalar_select 0, %s7, %s5
  $region1: #{tpu_custom_call.1} parent=0
    #allocation2 [shape = 'u8[8192]{0}', space=vmem, size = 0x2000, scoped, tag = 'input window, operand 0, single buffered']
    #allocation3 [shape = 's32[1]{0}', space=sflag, size = 0x4, scoped, tag = 'scoped memory for tpu_custom_call.1']
    #allocation4 [shape = 's32[1]{0}', space=sflag, size = 0x4, scoped, tag = 'scoped memory for tpu_custom_call.1']
    #allocation5 [shape = 'u8[4096]{0}', space=vmem, size = 0x1000, scoped, tag = 'input window, operand 1, single buffered']
    #allocation6 [shape = 's32[1]{0}', space=sflag, size = 0x4, scoped, tag = 'scoped memory for tpu_custom_call.1']
    #allocation7 [shape = 'u8[8192]{0}', space=vmem, size = 0x2000, scoped, tag = 'output window, operand 0, single buffered']
    %9 = vsyncpa [#allocation3], 0
    %10 = vsyncpa [#allocation6], 0
    %11 = vsyncpa [#allocation4], 0
    // Predicated region
    $region2: #{tpu_custom_call.1} parent=1 // pred_check
      _
    $region3: #{tpu_custom_call.1} parent=1 // pred_check_branch
      %13 = sbr.rel (0) target = $region5
    $region4: #{tpu_custom_call.1} parent=1 // pred_region
      %15 = vsyncadd [#allocation3], 0
      %s16 = sshll.u32 %s0, 4
      %s17 = int_to_ptr.hbm [resolvable:$true] %s16
      %s18 = sshll.u32 [#allocation2], 4
      %s19 = int_to_ptr.vmem [resolvable:$true] %s18
      %24 = dma.hbm_to_vmem [thread:$0]  %s17, 256, %s19, [#allocation3], 32, 32, 2
    $region5: #{tpu_custom_call.1} parent=1 // pred_fallthru
      _
    // Predicated region
    $region6: #{tpu_custom_call.1} parent=1 // pred_check
      _
    $region7: #{tpu_custom_call.1} parent=1 // pred_check_branch
      %26 = sbr.rel (0) target = $region9
    $region8: #{tpu_custom_call.1} parent=1 // pred_region
      %28 = vsyncadd [#allocation6], 0
      %s30 = sshll.u32 %s1, 4
      %s31 = int_to_ptr.hbm [resolvable:$true] %s30
      %s32 = sshll.u32 [#allocation5], 4
      %s33 = int_to_ptr.vmem [resolvable:$true] %s32
      %35 = dma.hbm_to_vmem [thread:$0]  %s31, 128, %s33, [#allocation6]
    $region9: #{tpu_custom_call.1} parent=1 // pred_fallthru
      _
    // Predicated region
    $region10: #{tpu_custom_call.1} parent=1 // pred_check
      _
    $region11: #{tpu_custom_call.1} parent=1 // pred_check_branch
      %37 = sbr.rel (0) target = $region13
    $region12: #{tpu_custom_call.1} parent=1 // pred_region
      _
    $region13: #{tpu_custom_call.1} parent=1 // pred_fallthru
      _
    // Predicated region
    $region14: #{tpu_custom_call.1} parent=1 // pred_check
      _
    $region15: #{tpu_custom_call.1} parent=1 // pred_check_branch
      %39 = sbr.rel (0) target = $region17
    $region16: #{tpu_custom_call.1} parent=1 // pred_region
      _
    $region17: #{tpu_custom_call.1} parent=1 // pred_fallthru
      _
    // Predicated region
    $region18: #{tpu_custom_call.1} parent=1 // pred_check
      _
    $region19: #{tpu_custom_call.1} parent=1 // pred_check_branch
      %41 = sbr.rel (0) target = $region21
    $region20: #{tpu_custom_call.1} parent=1 // pred_region
      %43 = dma.done [#allocation3], 256
    $region21: #{tpu_custom_call.1} parent=1 // pred_fallthru
      _
    // Predicated region
    $region22: #{tpu_custom_call.1} parent=1 // pred_check
      _
    $region23: #{tpu_custom_call.1} parent=1 // pred_check_branch
      %45 = sbr.rel (0) target = $region25
    $region24: #{tpu_custom_call.1} parent=1 // pred_region
      %47 = dma.done [#allocation6], 128
    $region25: #{tpu_custom_call.1} parent=1 // pred_fallthru
      _
    %v48 = vld [vmem:[#allocation2] sm:$0x3]
    %v49 = vld [vmem:[#allocation2 + $0x2] sm:$0x3]
    %v50 = vld [vmem:[#allocation2 + $0x4] sm:$0x3]
    %v51 = vld [vmem:[#allocation2 + $0x6] sm:$0x3]
    %v52 = vld [vmem:[#allocation2 + $0x8] sm:$0x3]
    %v53 = vld [vmem:[#allocation2 + $0xa] sm:$0x3]
    %v54 = vld [vmem:[#allocation2 + $0xc] sm:$0x3]
    %v55 = vld [vmem:[#allocation2 + $0xe] sm:$0x3]
    %vm56 = vcmask 254976
    %v57 = vsel %vm56, %v48, 0.0
    %58 = vadd.xlane.f32.xlu0 %v57
    %v59 = vpop.xlane.xlu0 %58
    %v60 = vsel %vm56, %v49, 0.0
    %61 = vadd.xlane.f32.xlu0 %v60
    %v62 = vpop.xlane.xlu0 %61
    %v63 = vsel %vm56, %v50, 0.0
    %64 = vadd.xlane.f32.xlu0 %v63
    %v65 = vpop.xlane.xlu0 %64
    %v66 = vsel %vm56, %v51, 0.0
    %67 = vadd.xlane.f32.xlu0 %v66
    %v68 = vpop.xlane.xlu0 %67
    %v69 = vsel %vm56, %v52, 0.0
    %70 = vadd.xlane.f32.xlu0 %v69
    %v71 = vpop.xlane.xlu0 %70
    %v72 = vsel %vm56, %v53, 0.0
    %73 = vadd.xlane.f32.xlu0 %v72
    %v74 = vpop.xlane.xlu0 %73
    %v75 = vsel %vm56, %v54, 0.0
    %76 = vadd.xlane.f32.xlu0 %v75
    %v77 = vpop.xlane.xlu0 %76
    %v78 = vsel %vm56, %v55, 0.0
    %79 = vadd.xlane.f32.xlu0 %v78
    %v80 = vpop.xlane.xlu0 %79
    %v81 = vrcp.pop 32.0
    %v82 = vmul.f32 32.0, %v81
    %v83 = vsub.f32 1.0, %v82
    %v84 = vmul.f32 %v81, %v83
    %v85 = vadd.f32 %v81, %v84
    %vm86 = vweird.f32 %v81
    %v87 = vsel %vm86, %v81, %v85
    %v88 = vmul.f32 %v59, %v87
    %v89 = vmul.f32 %v62, %v87
    %v90 = vmul.f32 %v65, %v87
    %v91 = vmul.f32 %v68, %v87
    %v92 = vmul.f32 %v71, %v87
    %v93 = vmul.f32 %v74, %v87
    %v94 = vmul.f32 %v77, %v87
    %v95 = vmul.f32 %v80, %v87
    %v96 = vsub.f32 %v48, %v88
    %v97 = vsub.f32 %v49, %v89
    %v98 = vsub.f32 %v50, %v90
    %v99 = vsub.f32 %v51, %v91
    %v100 = vsub.f32 %v52, %v92
    %v101 = vsub.f32 %v53, %v93
    %v102 = vsub.f32 %v54, %v94
    %v103 = vsub.f32 %v55, %v95
    %v104 = vmul.f32 %v96, %v96
    %v105 = vmul.f32 %v97, %v97
    %v106 = vmul.f32 %v98, %v98
    %v107 = vmul.f32 %v99, %v99
    %v108 = vmul.f32 %v100, %v100
    %v109 = vmul.f32 %v101, %v101
    %v110 = vmul.f32 %v102, %v102
    %v111 = vmul.f32 %v103, %v103
    %v112 = vsel %vm56, %v104, 0.0
    %113 = vadd.xlane.f32.xlu0 %v112
    %v114 = vpop.xlane.xlu0 %113
    %v115 = vsel %vm56, %v105, 0.0
    %116 = vadd.xlane.f32.xlu0 %v115
    %v117 = vpop.xlane.xlu0 %116
    %v118 = vsel %vm56, %v106, 0.0
    %119 = vadd.xlane.f32.xlu0 %v118
    %v120 = vpop.xlane.xlu0 %119
    %v121 = vsel %vm56, %v107, 0.0
    %122 = vadd.xlane.f32.xlu0 %v121
    %v123 = vpop.xlane.xlu0 %122
    %v124 = vsel %vm56, %v108, 0.0
    %125 = vadd.xlane.f32.xlu0 %v124
    %v126 = vpop.xlane.xlu0 %125
    %v127 = vsel %vm56, %v109, 0.0
    %128 = vadd.xlane.f32.xlu0 %v127
    %v129 = vpop.xlane.xlu0 %128
    %v130 = vsel %vm56, %v110, 0.0
    %131 = vadd.xlane.f32.xlu0 %v130
    %v132 = vpop.xlane.xlu0 %131
    %v133 = vsel %vm56, %v111, 0.0
    %134 = vadd.xlane.f32.xlu0 %v133
    %v135 = vpop.xlane.xlu0 %134
    %v136 = vmul.f32 %v114, %v87
    %v137 = vmul.f32 %v117, %v87
    %v138 = vmul.f32 %v120, %v87
    %v139 = vmul.f32 %v123, %v87
    %v140 = vmul.f32 %v126, %v87
    %v141 = vmul.f32 %v129, %v87
    %v142 = vmul.f32 %v132, %v87
    %v143 = vmul.f32 %v135, %v87
    %v144 = vadd.f32 %v136, 1e-05
    %v145 = vadd.f32 %v137, 1e-05
    %v146 = vadd.f32 %v138, 1e-05
    %v147 = vadd.f32 %v139, 1e-05
    %v148 = vadd.f32 %v140, 1e-05
    %v149 = vadd.f32 %v141, 1e-05
    %v150 = vadd.f32 %v142, 1e-05
    %v151 = vadd.f32 %v143, 1e-05
    %v152 = vrsqrt.pop %v144
    %v153 = vmul.f32 %v152, %v144
    %v154 = vmul.f32 %v153, %v152
    %v155 = vmul.f32 0.5, %v154
    %v156 = vsub.f32 1.5, %v155
    %v157 = vmul.f32 %v152, %v156
    %vm158 = vweird.f32 %v144
    %vm159 = vweird.f32 %v152
    %vm160 = vmor %vm158, %vm159
    %v161 = vsel %vm160, %v152, %v157
    %v162 = vrsqrt.pop %v145
    %v163 = vmul.f32 %v162, %v145
    %v164 = vmul.f32 %v163, %v162
    %v165 = vmul.f32 0.5, %v164
    %v166 = vsub.f32 1.5, %v165
    %v167 = vmul.f32 %v162, %v166
    %vm168 = vweird.f32 %v145
    %vm169 = vweird.f32 %v162
    %vm170 = vmor %vm168, %vm169
    %v171 = vsel %vm170, %v162, %v167
    %v172 = vrsqrt.pop %v146
    %v173 = vmul.f32 %v172, %v146
    %v174 = vmul.f32 %v173, %v172
    %v175 = vmul.f32 0.5, %v174
    %v176 = vsub.f32 1.5, %v175
    %v177 = vmul.f32 %v172, %v176
    %vm178 = vweird.f32 %v146
    %vm179 = vweird.f32 %v172
    %vm180 = vmor %vm178, %vm179
    %v181 = vsel %vm180, %v172, %v177
    %v182 = vrsqrt.pop %v147
    %v183 = vmul.f32 %v182, %v147
    %v184 = vmul.f32 %v183, %v182
    %v185 = vmul.f32 0.5, %v184
    %v186 = vsub.f32 1.5, %v185
    %v187 = vmul.f32 %v182, %v186
    %vm188 = vweird.f32 %v147
    %vm189 = vweird.f32 %v182
    %vm190 = vmor %vm188, %vm189
    %v191 = vsel %vm190, %v182, %v187
    %v192 = vrsqrt.pop %v148
    %v193 = vmul.f32 %v192, %v148
    %v194 = vmul.f32 %v193, %v192
    %v195 = vmul.f32 0.5, %v194
    %v196 = vsub.f32 1.5, %v195
    %v197 = vmul.f32 %v192, %v196
    %vm198 = vweird.f32 %v148
    %vm199 = vweird.f32 %v192
    %vm200 = vmor %vm198, %vm199
    %v201 = vsel %vm200, %v192, %v197
    %v202 = vrsqrt.pop %v149
    %v203 = vmul.f32 %v202, %v149
    %v204 = vmul.f32 %v203, %v202
    %v205 = vmul.f32 0.5, %v204
    %v206 = vsub.f32 1.5, %v205
    %v207 = vmul.f32 %v202, %v206
    %vm208 = vweird.f32 %v149
    %vm209 = vweird.f32 %v202
    %vm210 = vmor %vm208, %vm209
    %v211 = vsel %vm210, %v202, %v207
    %v212 = vrsqrt.pop %v150
    %v213 = vmul.f32 %v212, %v150
    %v214 = vmul.f32 %v213, %v212
    %v215 = vmul.f32 0.5, %v214
    %v216 = vsub.f32 1.5, %v215
    %v217 = vmul.f32 %v212, %v216
    %vm218 = vweird.f32 %v150
    %vm219 = vweird.f32 %v212
    %vm220 = vmor %vm218, %vm219
    %v221 = vsel %vm220, %v212, %v217
    %v222 = vrsqrt.pop %v151
    %v223 = vmul.f32 %v222, %v151
    %v224 = vmul.f32 %v223, %v222
    %v225 = vmul.f32 0.5, %v224
    %v226 = vsub.f32 1.5, %v225
    %v227 = vmul.f32 %v222, %v226
    %vm228 = vweird.f32 %v151
    %vm229 = vweird.f32 %v222
    %vm230 = vmor %vm228, %vm229
    %v231 = vsel %vm230, %v222, %v227
    %v232 = vmul.f32 %v96, %v161
    %v233 = vmul.f32 %v97, %v171
    %v234 = vmul.f32 %v98, %v181
    %v235 = vmul.f32 %v99, %v191
    %v236 = vmul.f32 %v100, %v201
    %v237 = vmul.f32 %v101, %v211
    %v238 = vmul.f32 %v102, %v221
    %v239 = vmul.f32 %v103, %v231
    %v240 = vld [vmem:[%s2] sm:$0x1]
    %v242 = vperm.slane %v240, 0
    %v244 = vmul.f32 %v232, %v242
    %v245 = vmul.f32 %v233, %v242
    %v246 = vmul.f32 %v234, %v242
    %v247 = vmul.f32 %v235, %v242
    %v248 = vmul.f32 %v236, %v242
    %v249 = vmul.f32 %v237, %v242
    %v250 = vmul.f32 %v238, %v242
    %v251 = vmul.f32 %v239, %v242
    %v252 = vld [vmem:[%s3] sm:$0x1]
    %v254 = vperm.slane %v252, 0
    %v256 = vadd.f32 %v244, %v254
    %v257 = vadd.f32 %v245, %v254
    %v258 = vadd.f32 %v246, %v254
    %v259 = vadd.f32 %v247, %v254
    %v260 = vadd.f32 %v248, %v254
    %v261 = vadd.f32 %v249, %v254
    %v262 = vadd.f32 %v250, %v254
    %v263 = vadd.f32 %v251, %v254
    %v264 = vld [vmem:[#allocation5] sm:$0xff]
    %v266 = vrot.slane %v264, 1
    %v267 = vrot.slane %v264, 2
    %v268 = vrot.slane %v264, 3
    %v269 = vrot.slane %v264, 4
    %v270 = vrot.slane %v264, 5
    %v271 = vrot.slane %v264, 6
    %v272 = vrot.slane %v264, 7
    %v273 = vperm.slane %v264, 0
    %v274 = vperm.slane %v266, 0
    %v275 = vperm.slane %v267, 0
    %v276 = vperm.slane %v268, 0
    %v277 = vperm.slane %v269, 0
    %v278 = vperm.slane %v270, 0
    %v279 = vperm.slane %v271, 0
    %v280 = vperm.slane %v272, 0
    %v289 = vadd.f32 %v256, %v273
    %v290 = vadd.f32 %v257, %v274
    %v291 = vadd.f32 %v258, %v275
    %v292 = vadd.f32 %v259, %v276
    %v293 = vadd.f32 %v260, %v277
    %v294 = vadd.f32 %v261, %v278
    %v295 = vadd.f32 %v262, %v279
    %v296 = vadd.f32 %v263, %v280
    %297 = vst.msk [vmem:[#allocation7] sm:$0x3] %vm56, %v289
    %298 = vst.msk [vmem:[#allocation7 + $0x2] sm:$0x3] %vm56, %v290
    %299 = vst.msk [vmem:[#allocation7 + $0x4] sm:$0x3] %vm56, %v291
    %300 = vst.msk [vmem:[#allocation7 + $0x6] sm:$0x3] %vm56, %v292
    %301 = vst.msk [vmem:[#allocation7 + $0x8] sm:$0x3] %vm56, %v293
    %302 = vst.msk [vmem:[#allocation7 + $0xa] sm:$0x3] %vm56, %v294
    %303 = vst.msk [vmem:[#allocation7 + $0xc] sm:$0x3] %vm56, %v295
    %304 = vst.msk [vmem:[#allocation7 + $0xe] sm:$0x3] %vm56, %v296
    // Predicated region
    $region26: #{tpu_custom_call.1} parent=1 // pred_check
      _
    $region27: #{tpu_custom_call.1} parent=1 // pred_check_branch
      %306 = sbr.rel (0) target = $region29
    $region28: #{tpu_custom_call.1} parent=1 // pred_region
      %308 = vsyncadd [#allocation4], 0
      %s309 = sshll.u32 [#allocation7], 4
      %s310 = int_to_ptr.vmem [resolvable:$true] %s309
      %s311 = sshll.u32 %s4, 4
      %s312 = int_to_ptr.hbm [resolvable:$true] %s311
      %317 = dma.vmem_to_hbm [thread:$0]  %s310, 256, %s312, [#allocation4], 32, 32, 2
    $region29: #{tpu_custom_call.1} parent=1 // pred_fallthru
      _
    // Predicated region
    $region30: #{tpu_custom_call.1} parent=1 // pred_check
      _
    $region31: #{tpu_custom_call.1} parent=1 // pred_check_branch
      %319 = sbr.rel (0) target = $region33
    $region32: #{tpu_custom_call.1} parent=1 // pred_region
      %321 = dma.done [#allocation4], 256
    $region33: #{tpu_custom_call.1} parent=1 // pred_fallthru
      _
    %322 = vsyncpa [#allocation3], 1
    %323 = vsyncpa [#allocation6], 1
    %324 = vsyncpa [#allocation4], 1

</llo_original>
